<compile_context>
chip_gen: v5e
topology: v5e:2x2
jax: 0.10.0
libtpu: 0.0.40
codegen_flags: <defaults>
</compile_context>

<pallas_src>
import math

import jax
import jax.numpy as jnp
from jax import lax
from jax.experimental import pallas as pl
from jax.experimental.pallas import tpu as pltpu

_LOGSTD_LANE = 2  # lane index holding normal_logstd inside the packed vector


def _empty_kernel(packed_ref, out_ref):
    # packed_ref: (1, 128) f32 = [mean0, mean1, logstd, 0, ...]
    x = packed_ref[...]
    lanes = lax.broadcasted_iota(jnp.int32, x.shape, 1)
    # Pass the mean lanes straight through; apply exp only on the logstd lane.
    # exp runs on the EUP (separate slot); the select is a single VPU op.
    out_ref[...] = jnp.where(lanes == _LOGSTD_LANE, jnp.exp(x), x)


def empty_forward(params, adv_image, image, label, target, output_fields):
    """Pallas-backed equivalent of Empty.forward."""
    batch = adv_image.shape[0]  # images are only consulted for their batch size

    mean = params["normal_mean"].reshape(2).astype(jnp.float32)
    logstd = params["normal_logstd"].reshape(1).astype(jnp.float32)

    # One lane-dense (1, 128) slab: [mean0, mean1, logstd, 0, ...].
    packed = jnp.concatenate(
        [mean, logstd, jnp.zeros((128 - 3,), dtype=jnp.float32)]
    ).reshape(1, 128)

    packed_out = pl.pallas_call(
        _empty_kernel,
        out_shape=jax.ShapeDtypeStruct((1, 128), jnp.float32),
        in_specs=[pl.BlockSpec(memory_space=pltpu.VMEM)],
        out_specs=pl.BlockSpec(memory_space=pltpu.VMEM),
        # Output reuses the (temporary) packed input buffer in HBM.
        input_output_aliases={0: 0},
        # Near-zero cost: tell XLA not to serialize neighbors around this call.
        cost_estimate=pl.CostEstimate(flops=0, transcendentals=1,
                                      bytes_accessed=1024),
    )(packed)

    output = {}
    if "grad" in output_fields:
        # Equivalent to normal_mean.view(1, 2).repeat(B, 1); kept as a lazy
        # broadcast fused by XLA instead of materializing inside the kernel.
        output["grad"] = jnp.broadcast_to(packed_out[:, 0:2], (batch, 2))
    if "std" in output_fields:
        output["std"] = packed_out[0, _LOGSTD_LANE:_LOGSTD_LANE + 1]
    return output


def init_params(init_std=0.001):
    # Deterministic init matching Empty.__init__:
    #   normal_mean   = zeros(2)
    #   normal_logstd = ones(1) * log(init_std)
    return {
        "normal_mean": jnp.zeros((2,), dtype=jnp.float32),
        "normal_logstd": jnp.full((1,), math.log(init_std), dtype=jnp.float32),
    }


# TODO(synk): self.whiten_func = lambda t: 1/0 is an intentional poison-pill
# (never called in forward); no Pallas equivalent emitted.


if __name__ == "__main__":
    key = jax.random.PRNGKey(0)
    k1, k2, k3, k4 = jax.random.split(key, 4)

    B, C, H, W = 2, 4, 16, 16
    adv_image = jax.random.uniform(k1, (B, C, H, W), dtype=jnp.float32)
    image = jax.random.uniform(k2, (B, C, H, W), dtype=jnp.float32)
    label = jax.random.randint(k3, (B,), 0, 10)
    target = jax.random.randint(k4, (B,), 0, 10)

    params = init_params(init_std=0.001)

    out = empty_forward(params, adv_image, image, label, target,
                        output_fields=("grad", "std"))
    jax.block_until_ready(out)

    # Sanity checks against the PyTorch reference semantics.
    assert out["grad"].shape == (B, 2)
    assert out["std"].shape == (1,)
    assert bool(jnp.allclose(out["grad"], jnp.zeros((B, 2))))
    assert bool(jnp.allclose(out["std"],
                             jnp.exp(jnp.array([math.log(0.001)], jnp.float32)),
                             rtol=1e-6))

    print("KERNEL_OK")
</pallas_src>

<mosaic_0001>
module attributes {stable_mosaic.version = 11 : i64} {
  func.func @_empty_kernel(%arg0: memref<1x128xf32, #tpu.memory_space<vmem>>, %arg1: memref<1x128xf32, #tpu.memory_space<vmem>>) attributes {dimension_semantics = [], scalar_prefetch = 0 : i64, scratch_operands = 0 : i64, tpu.core_type = #tpu.core_type<tc>} {
    %c0 = arith.constant 0 : index
    %c0_0 = arith.constant 0 : index
    %0 = vector.load %arg0[%c0, %c0_0] : memref<1x128xf32, #tpu.memory_space<vmem>>, vector<1x128xf32>
    %1 = tpu.iota {dimensions = array<i32: 1>} : vector<1x128xi32>
    %c2_i32 = arith.constant 2 : i32
    %2 = vector.broadcast %c2_i32 : i32 to vector<1x128xi32>
    %3 = arith.cmpi eq, %1, %2 : vector<1x128xi32>
    %4 = math.exp %0 : vector<1x128xf32>
    %5 = arith.select %3, %4, %0 : vector<1x128xi1>, vector<1x128xf32>
    %c0_1 = arith.constant 0 : index
    %c0_2 = arith.constant 0 : index
    %6 = vector.load %arg1[%c0_1, %c0_2] : memref<1x128xf32, #tpu.memory_space<vmem>>, vector<1x128xf32>
    tpu.vector_store %arg1[%c0_1, %c0_2], %5 {strides = array<i32>} : memref<1x128xf32, #tpu.memory_space<vmem>>, vector<1x128xf32>,
    return
  }
}

</mosaic_0001>

<llo_original>
// kernel: tpu_custom_call.1
$region0: #{tpu_custom_call.1}
  #allocation0 [shape = 'u32[]', space=smem, size = 0x4, offset = 0x4, fixed_abs, tag = 'smem constant byte address 0x4 - core index']
  #allocation1 [shape = 'u32[72,128]{1,0:T(1,128)}', space=vmem, size = 0x9000, scoped, tag = 'internal scratch']
  %s0 = inlined_call_operand.hbm [shape: f32[1,128], index: 0, kind: input, shape index: {}, may-alias: {0,1}]
  %s1 = inlined_call_operand.hbm [shape: f32[1,128], index: 1, kind: output, shape index: {}, may-alias: {0,1}]
  %s2 = sld [smem:[#allocation0]]
  $region18: #{tpu_custom_call.1} parent=0
    _
  %s4 = ssub.s32 1, %s2
  %s5 = scalar_select 0, %s4, %s2
  $region1: #{tpu_custom_call.1} parent=0
    #allocation2 [shape = 'u8[512]{0}', space=vmem, size = 0x400, scoped, tag = 'input window, operand 0, single buffered']
    #allocation3 [shape = 's32[1]{0}', space=sflag, size = 0x4, scoped, tag = 'scoped memory for tpu_custom_call.1']
    #allocation4 [shape = 's32[1]{0}', space=sflag, size = 0x4, scoped, tag = 'scoped memory for tpu_custom_call.1']
    #allocation5 [shape = 'u8[512]{0}', space=vmem, size = 0x400, scoped, tag = 'output window, operand 0, single buffered']
    %6 = vsyncpa [#allocation3], 0
    %7 = vsyncpa [#allocation4], 0
    // Predicated region
    $region2: #{tpu_custom_call.1} parent=1 // pred_check
      _
    $region3: #{tpu_custom_call.1} parent=1 // pred_check_branch
      %9 = sbr.rel (0) target = $region5
    $region4: #{tpu_custom_call.1} parent=1 // pred_region
      %11 = vsyncadd [#allocation3], 0
      %s13 = sshll.u32 %s0, 4
      %s14 = int_to_ptr.hbm [resolvable:$true] %s13
      %s15 = sshll.u32 [#allocation2], 4
      %s16 = int_to_ptr.vmem [resolvable:$true] %s15
      %18 = dma.hbm_to_vmem [thread:$0]  %s14, 16, %s16, [#allocation3]
    $region5: #{tpu_custom_call.1} parent=1 // pred_fallthru
      _
    // Predicated region
    $region6: #{tpu_custom_call.1} parent=1 // pred_check
      _
    $region7: #{tpu_custom_call.1} parent=1 // pred_check_branch
      %20 = sbr.rel (0) target = $region9
    $region8: #{tpu_custom_call.1} parent=1 // pred_region
      %22 = dma.done [#allocation3], 16
    $region9: #{tpu_custom_call.1} parent=1 // pred_fallthru
      _
    %v23 = vld [vmem:[#allocation2] sm:$0x1]
    %v24 = vlaneseq
    %v25 = vand.u32 %v24, 127
    %vm26 = vcmp.eq.s32.totalorder %v25, 2
    %v27 = vmul.f32 %v23, 1.442695
    %v28 = vpow.pop %v27
    %v29 = vsel %vm26, %v28, %v23
    %30 = vst [vmem:[#allocation5] sm:$0x1] %v29
    // Predicated region
    $region10: #{tpu_custom_call.1} parent=1 // pred_check
      _
    $region11: #{tpu_custom_call.1} parent=1 // pred_check_branch
      %32 = sbr.rel (0) target = $region13
    $region12: #{tpu_custom_call.1} parent=1 // pred_region
      %34 = vsyncadd [#allocation4], 0
      %s36 = sshll.u32 [#allocation5], 4
      %s37 = int_to_ptr.vmem [resolvable:$true] %s36
      %s38 = sshll.u32 %s1, 4
      %s39 = int_to_ptr.hbm [resolvable:$true] %s38
      %41 = dma.vmem_to_hbm [thread:$0]  %s37, 16, %s39, [#allocation4]
    $region13: #{tpu_custom_call.1} parent=1 // pred_fallthru
      _
    // Predicated region
    $region14: #{tpu_custom_call.1} parent=1 // pred_check
      _
    $region15: #{tpu_custom_call.1} parent=1 // pred_check_branch
      %43 = sbr.rel (0) target = $region17
    $region16: #{tpu_custom_call.1} parent=1 // pred_region
      %45 = dma.done [#allocation4], 16
    $region17: #{tpu_custom_call.1} parent=1 // pred_fallthru
      _
    %46 = vsyncpa [#allocation3], 1
    %47 = vsyncpa [#allocation4], 1

</llo_original>
